<compile_context>
chip_gen: v5e
topology: v5e:2x2
jax: 0.10.0
libtpu: 0.0.40
codegen_flags: <defaults>
</compile_context>

<pallas_src>
import jax
import jax.numpy as jnp
from jax import lax
from jax.experimental import pallas as pl
from jax.experimental.pallas import tpu as pltpu


LANE = 128  # lane-tile width; each of q/k/v gets one padded lane tile in the fused weight


def fuse_head_weights(wq, wk, wv):
    """One-time weight transform: scale-fold + pad-to-128-lanes + concat -> (C, 3*LANE)."""
    C, H = wq.shape
    assert H <= LANE, "single-head kernel assumes head_size <= 128"
    pad = lambda w: jnp.pad(w, ((0, 0), (0, LANE - H)))
    scale = C ** -0.5  # PyTorch reference scales by n_embed (C), not head_size
    return jnp.concatenate([pad(wq * scale), pad(wk), pad(wv)], axis=1)


def head_kernel(x_ref, w_ref, o_ref):
    # x_ref: (T, C)        one batch element's activations
    # w_ref: (C, 3*LANE)   fused [W_q*C^-0.5 | W_k | W_v], each zero-padded to 128 lanes
    # o_ref: (T, LANE)     lane-dense output block (columns >= head_size are zero)
    T, C = x_ref.shape
    P = w_ref.shape[1] // 3

    x = x_ref[...]
    w = w_ref[...]

    # Single fused projection: (T, C) @ (C, 3P) -> (T, 3P), f32 accumulation.
    # q/k/v stay in f32 for the score matmul (MXU is idle at this size; precision wins).
    qkv = jnp.dot(x, w, preferred_element_type=jnp.float32)

    # Lane-tile-aligned slices (offsets 0 / 128 / 256) -> free views, no lane shifts.
    q = qkv[:, 0 * P:1 * P]
    k = qkv[:, 1 * P:2 * P]
    v = qkv[:, 2 * P:3 * P]

    # q @ k^T as a contraction over the (padded) head dim; padded zero columns are inert.
    scores = lax.dot_general(
        q, k, dimension_numbers=(((1,), (1,)), ((), ())),
        preferred_element_type=jnp.float32)                     # (T, T)

    # Causal mask built in-kernel (no tril buffer DMA). -1e30 is safe: diagonal always kept.
    row = lax.broadcasted_iota(jnp.int32, (T, T), 0)
    col = lax.broadcasted_iota(jnp.int32, (T, T), 1)
    scores = jnp.where(row >= col, scores, jnp.float32(-1e30))

    # Numerically stable softmax in f32.
    m = jnp.max(scores, axis=-1, keepdims=True)
    e = jnp.exp(scores - m)
    weights = e / jnp.sum(e, axis=-1, keepdims=True)            # (T, T)

    # TODO(synk): nn.Dropout is identity in eval mode; training-mode dropout not implemented.

    out = jnp.dot(weights, v, preferred_element_type=jnp.float32)  # (T, P) lane-dense
    o_ref[...] = out.astype(o_ref.dtype)


def head_forward(x, w_fused, head_size):
    """x: (B, T, C); w_fused: (C, 3*LANE) from fuse_head_weights -> (B, T, head_size)."""
    B, T, C = x.shape
    P3 = w_fused.shape[1]
    P = P3 // 3

    out_padded = pl.pallas_call(
        head_kernel,
        out_shape=jax.ShapeDtypeStruct((B, T, P), x.dtype),
        grid=(B,),
        in_specs=[
            pl.BlockSpec((None, T, C), lambda b: (b, 0, 0)),   # per-batch activation tile
            pl.BlockSpec((C, P3), lambda b: (0, 0)),           # fused weight, resident
        ],
        out_specs=pl.BlockSpec((None, T, P), lambda b: (b, 0, 0)),  # (8,128) unmasked store
        compiler_params=pltpu.CompilerParams(
            dimension_semantics=("parallel",)),                # v7x: one batch per TensorCore
    )(x, w_fused)

    # Drop the zero-padded lanes.  In a fused multi-head kernel these lanes would carry the
    # other heads and be consumed directly, lane-dense, by the output projection.
    return out_padded[..., :head_size]


def reference_head(x, wq, wk, wv):
    """Pure-JAX reference of the PyTorch forward (eval-mode dropout)."""
    B, T, C = x.shape
    q = x @ wq
    k = x @ wk
    v = x @ wv
    scores = (q @ jnp.swapaxes(k, -2, -1)) * (C ** -0.5)
    tril = jnp.tril(jnp.ones((T, T), dtype=bool))
    scores = jnp.where(tril[None, :, :], scores, -jnp.inf)
    w = jax.nn.softmax(scores, axis=-1)
    return w @ v


if __name__ == "__main__":
    # Small shapes implied by the module: B=2, T(block_size)=8, C(n_embed)=32, head_size=16
    B, T, C, Hd = 2, 8, 32, 16

    key = jax.random.PRNGKey(0)
    kx, kq, kk, kv = jax.random.split(key, 4)

    x = jax.random.normal(kx, (B, T, C), dtype=jnp.float32)
    # deterministic "Linear" weights, stored as (C, H) = W.T
    wq = jax.random.normal(kq, (C, Hd), dtype=jnp.float32) * (C ** -0.5)
    wk = jax.random.normal(kk, (C, Hd), dtype=jnp.float32) * (C ** -0.5)
    wv = jax.random.normal(kv, (C, Hd), dtype=jnp.float32) * (C ** -0.5)

    # One-time weight fusion (scale fold + lane padding), hoisted out of the per-call path.
    w_fused = fuse_head_weights(wq, wk, wv)

    out = head_forward(x, w_fused, Hd)
    out = jax.block_until_ready(out)

    ref = reference_head(x, wq, wk, wv)
    assert out.shape == (B, T, Hd)
    assert jnp.allclose(out, ref, atol=1e-4, rtol=1e-4), "mismatch vs JAX reference"

    print("KERNEL_OK")
</pallas_src>

<mosaic_0001>
module attributes {stable_mosaic.version = 11 : i64} {
  func.func @head_kernel(%arg0: i32, %arg1: memref<1x8x32xf32, #tpu.memory_space<vmem>>, %arg2: memref<32x384xf32, #tpu.memory_space<vmem>>, %arg3: memref<1x8x128xf32, #tpu.memory_space<vmem>>) attributes {dimension_semantics = [#tpu.dimension_semantics<parallel>], iteration_bounds = array<i64: 2>, scalar_prefetch = 0 : i64, scratch_operands = 0 : i64, tpu.core_type = #tpu.core_type<tc>, window_params = [{transform_indices = @transform_0, window_bounds = array<i64: 1, 8, 32>}, {pipeline_mode = #tpu.pipeline_mode<synchronous>, transform_indices = @transform_1, window_bounds = array<i64: 32, 384>}, {transform_indices = @transform_2, window_bounds = array<i64: 1, 8, 128>}]} {
    %c0 = arith.constant 0 : index
    %c0_0 = arith.constant 0 : index
    %c0_1 = arith.constant 0 : index
    %0 = vector.load %arg1[%c0, %c0_0, %c0_1] : memref<1x8x32xf32, #tpu.memory_space<vmem>>, vector<1x8x32xf32>
    %1 = vector.shape_cast %0 : vector<1x8x32xf32> to vector<8x32xf32>
    %c0_2 = arith.constant 0 : index
    %c0_3 = arith.constant 0 : index
    %2 = vector.load %arg2[%c0_2, %c0_3] : memref<32x384xf32, #tpu.memory_space<vmem>>, vector<32x384xf32>
    %cst = arith.constant dense<0.000000e+00> : vector<8x384xf32>
    %3 = tpu.matmul %1, %2, %cst {dimension_numbers = #tpu.dot_dimension_numbers<[1], [0], [0], [1], [0, 0, 1, 1], [], []>} : vector<8x32xf32>, vector<32x384xf32>, vector<8x384xf32> -> vector<8x384xf32>
    %4 = vector.extract_strided_slice %3 {offsets = [0, 0], sizes = [8, 128], strides = [1, 1]} : vector<8x384xf32> to vector<8x128xf32>
    %5 = vector.extract_strided_slice %3 {offsets = [0, 128], sizes = [8, 128], strides = [1, 1]} : vector<8x384xf32> to vector<8x128xf32>
    %6 = vector.extract_strided_slice %3 {offsets = [0, 256], sizes = [8, 128], strides = [1, 1]} : vector<8x384xf32> to vector<8x128xf32>
    %cst_4 = arith.constant dense<0.000000e+00> : vector<8x8xf32>
    %7 = tpu.matmul %4, %5, %cst_4 {dimension_numbers = #tpu.dot_dimension_numbers<[1], [1], [0], [0], [0, 0, 1, 0], [], []>} : vector<8x128xf32>, vector<8x128xf32>, vector<8x8xf32> -> vector<8x8xf32>
    %8 = tpu.iota {dimensions = array<i32: 0>} : vector<8x8xi32>
    %9 = tpu.iota {dimensions = array<i32: 1>} : vector<8x8xi32>
    %10 = arith.cmpi sge, %8, %9 : vector<8x8xi32>
    %cst_5 = arith.constant -1.000000e+30 : f32
    %11 = vector.broadcast %cst_5 : f32 to vector<8x8xf32>
    %12 = arith.select %10, %7, %11 : vector<8x8xi1>, vector<8x8xf32>
    %cst_6 = arith.constant dense<0xFF800000> : vector<8xf32>
    %13 = vector.multi_reduction <maximumf>, %12, %cst_6 [1] : vector<8x8xf32> to vector<8xf32>
    %14 = vector.shape_cast %13 : vector<8xf32> to vector<8x1xf32>
    %15 = vector.broadcast %14 : vector<8x1xf32> to vector<8x8xf32>
    %16 = arith.subf %12, %15 : vector<8x8xf32>
    %17 = math.exp %16 : vector<8x8xf32>
    %cst_7 = arith.constant dense<0.000000e+00> : vector<8xf32>
    %18 = vector.multi_reduction <add>, %17, %cst_7 [1] : vector<8x8xf32> to vector<8xf32>
    %19 = vector.shape_cast %18 : vector<8xf32> to vector<8x1xf32>
    %20 = vector.broadcast %19 : vector<8x1xf32> to vector<8x8xf32>
    %21 = arith.divf %17, %20 : vector<8x8xf32>
    %cst_8 = arith.constant dense<0.000000e+00> : vector<8x128xf32>
    %22 = tpu.matmul %21, %6, %cst_8 {dimension_numbers = #tpu.dot_dimension_numbers<[1], [0], [0], [1], [0, 0, 1, 1], [], []>} : vector<8x8xf32>, vector<8x128xf32>, vector<8x128xf32> -> vector<8x128xf32>
    %c0_9 = arith.constant 0 : index
    %c0_10 = arith.constant 0 : index
    %c0_11 = arith.constant 0 : index
    %23 = vector.load %arg3[%c0_9, %c0_10, %c0_11] : memref<1x8x128xf32, #tpu.memory_space<vmem>>, vector<1x8x128xf32>
    %24 = vector.shape_cast %23 : vector<1x8x128xf32> to vector<8x128xf32>
    %25 = vector.shape_cast %22 : vector<8x128xf32> to vector<1x8x128xf32>
    tpu.vector_store %arg3[%c0_9, %c0_10, %c0_11], %25 {strides = array<i32>} : memref<1x8x128xf32, #tpu.memory_space<vmem>>, vector<1x8x128xf32>,
    return
  }
  func.func @transform_0(%arg0: i32) -> (i32, i32, i32) {
    %c0_i32 = arith.constant 0 : i32
    %c0_i32_0 = arith.constant 0 : i32
    %c0_i32_1 = arith.constant 0 : i32
    return %arg0, %c0_i32, %c0_i32_0 : i32, i32, i32
  }
  func.func @transform_1(%arg0: i32) -> (i32, i32) {
    %c0_i32 = arith.constant 0 : i32
    %c0_i32_0 = arith.constant 0 : i32
    %c0_i32_1 = arith.constant 0 : i32
    return %c0_i32, %c0_i32_0 : i32, i32
  }
  func.func @transform_2(%arg0: i32) -> (i32, i32, i32) {
    %c0_i32 = arith.constant 0 : i32
    %c0_i32_0 = arith.constant 0 : i32
    %c0_i32_1 = arith.constant 0 : i32
    return %arg0, %c0_i32, %c0_i32_0 : i32, i32, i32
  }
}

</mosaic_0001>

<llo_original>
// kernel: tpu_custom_call.1
$region0: #{tpu_custom_call.1}
  #allocation0 [shape = 'u32[]', space=smem, size = 0x4, offset = 0x4, fixed_abs, tag = 'smem constant byte address 0x4 - core index']
  #allocation1 [shape = 'u32[72,128]{1,0:T(1,128)}', space=vmem, size = 0x9000, scoped, tag = 'internal scratch']
  %s0 = inlined_call_operand.hbm [shape: f32[2,8,32], index: 0, kind: input, shape index: {}]
  %s1 = inlined_call_operand.hbm [shape: f32[32,384], index: 1, kind: input, shape index: {}]
  %s2 = inlined_call_operand.hbm [shape: f32[2,8,128], index: 2, kind: output, shape index: {}]
  %s3 = sld [smem:[#allocation0]]
  $region49: #{tpu_custom_call.1} parent=0
    _
  %s5 = ssub.s32 1, %s3
  %s6 = scalar_select 0, %s5, %s3
  $region1: #{tpu_custom_call.1} parent=0
    #allocation2 [shape = 'u8[8192]{0}', space=vmem, size = 0x2000, scoped, tag = 'input window, operand 0']
    #allocation3 [shape = 's32[2]{0}', space=sflag, size = 0x8, scoped, tag = 'scoped memory for tpu_custom_call.1']
    #allocation4 [shape = 's32[2]{0}', space=sflag, size = 0x8, scoped, tag = 'scoped memory for tpu_custom_call.1']
    #allocation5 [shape = 'u8[49152]{0}', space=vmem, size = 0xc000, scoped, tag = 'input window, operand 1, single buffered']
    #allocation6 [shape = 's32[1]{0}', space=sflag, size = 0x4, scoped, tag = 'scoped memory for tpu_custom_call.1']
    #allocation7 [shape = 'u8[8192]{0}', space=vmem, size = 0x2000, scoped, tag = 'output window, operand 0']
    %7 = vsyncpa [#allocation3], 0
    %s8 = scalar_lea.sflag [#allocation3], 1
    %9 = vsyncpa %s8, 0
    %10 = vsyncpa [#allocation6], 0
    %11 = vsyncpa [#allocation4], 0
    %s12 = scalar_lea.sflag [#allocation4], 1
    %13 = vsyncpa %s12, 0
    loop: start=0, step=1, limit=4
    $region2: #{tpu_custom_call.1} parent=1 // loop_pre_header
      _
    $region3: #{tpu_custom_call.1} parent=1 // loop_header
      %s15 = sphi 0, %s19
      %p16 = scmp.ge.s32.totalorder %s15, 4
      %s25 = sphi 0, %s27
      %s28 = sphi 0, %s25
      %s29 = sphi 0, %s28
      %s45 = sphi 0, %s29
      %s49 = sphi 0, %s49
      %s51 = sphi 0, %s49
      %s52 = sphi 0, %s51
      %s66 = sphi 0, %s52
      %s72 = sphi 0, %s74
      %s75 = sphi 0, %s72
      %s76 = sphi 0, %s75
      %s92 = sphi 0, %s76
    $region4: #{tpu_custom_call.1} parent=1 // loop_header_branch
      %18 = sbr.rel (%p16) target = $region8
    $region5: #{tpu_custom_call.1} parent=1 // loop_body
      %s20 = ssub.s32 %s15, 1
      %s21 = ssub.s32 %s15, 2
      %s22 = sadd.s32 %s15, 1
      %s23 = ssub.s32 %s15, %s22
      %p24 = scmp.eq.s32.totalorder %s23, 0
      %s26 = sadd.s32 %s25, 1
      %s27 = scalar_select %p24, %s25, %s26
      %p30 = pneg %p24
      %p31 = scmp.eq.s32.totalorder %s15, 1
      %p32 = por %p30, %p31
      %p33 = scmp.ne.s32.totalorder %s25, %s28
      %p34 = scmp.eq.s32.totalorder %s15, 0
      %p35 = por %p33, %p34
      %p36 = scmp.ne.s32.totalorder %s25, %s28
      %p37 = scmp.eq.s32.totalorder %s20, 1
      %p38 = por %p36, %p37
      %p39 = scmp.ne.s32.totalorder %s28, %s29
      %p40 = scmp.eq.s32.totalorder %s20, 0
      %p41 = por %p39, %p40
      %p42 = scmp.ne.s32.totalorder %s28, %s29
      %p43 = scmp.eq.s32.totalorder %s21, 1
      %p44 = por %p42, %p43
      %p46 = scmp.ne.s32.totalorder %s29, %s45
      %p47 = scmp.eq.s32.totalorder %s21, 0
      %p48 = por %p46, %p47
      %s50 = sadd.s32 %s49, 1
      %p53 = scmp.eq.s32.totalorder %s15, 1
      %p54 = scmp.ne.s32.totalorder %s49, %s51
      %p55 = scmp.eq.s32.totalorder %s15, 0
      %p56 = por %p54, %p55
      %p57 = scmp.ne.s32.totalorder %s49, %s51
      %p58 = scmp.eq.s32.totalorder %s20, 1
      %p59 = por %p57, %p58
      %p60 = scmp.ne.s32.totalorder %s51, %s52
      %p61 = scmp.eq.s32.totalorder %s20, 0
      %p62 = por %p60, %p61
      %p63 = scmp.ne.s32.totalorder %s51, %s52
      %p64 = scmp.eq.s32.totalorder %s21, 1
      %p65 = por %p63, %p64
      %p67 = scmp.ne.s32.totalorder %s52, %s66
      %p68 = scmp.eq.s32.totalorder %s21, 0
      %p69 = por %p67, %p68
      %s70 = ssub.s32 %s15, %s22
      %p71 = scmp.eq.s32.totalorder %s70, 0
      %s73 = sadd.s32 %s72, 1
      %s74 = scalar_select %p71, %s72, %s73
      %p77 = pneg %p71
      %p78 = scmp.eq.s32.totalorder %s15, 1
      %p79 = por %p77, %p78
      %p80 = scmp.ne.s32.totalorder %s72, %s75
      %p81 = scmp.eq.s32.totalorder %s15, 0
      %p82 = por %p80, %p81
      %p83 = scmp.ne.s32.totalorder %s72, %s75
      %p84 = scmp.eq.s32.totalorder %s20, 1
      %p85 = por %p83, %p84
      %p86 = scmp.ne.s32.totalorder %s75, %s76
      %p87 = scmp.eq.s32.totalorder %s20, 0
      %p88 = por %p86, %p87
      %p89 = scmp.ne.s32.totalorder %s75, %s76
      %p90 = scmp.eq.s32.totalorder %s21, 1
      %p91 = por %p89, %p90
      %p93 = scmp.ne.s32.totalorder %s76, %s92
      %p94 = scmp.eq.s32.totalorder %s21, 0
      %p95 = por %p93, %p94
      %p96 = scmp.le.s32.totalorder 1, %s15
      %p97 = scmp.lt.s32.totalorder %s15, 3
      %p98 = pnand %p96, %p97
      %p99 = pneg %p98
      // Predicated region
      $region9: #{tpu_custom_call.1} parent=5 // pred_check
        _
      $region10: #{tpu_custom_call.1} parent=5 // pred_check_branch
        %101 = sbr.rel (%p98) target = $region12
      $region11: #{tpu_custom_call.1} parent=5 // pred_region
        %s102 = ssub.s32 %s15, 1
        // Predicated region
        $region13: #{tpu_custom_call.1} parent=11 // pred_check
          %p103 = pneg %p62
        $region14: #{tpu_custom_call.1} parent=11 // pred_check_branch
          %105 = sbr.rel (%p103) target = $region16
        $region15: #{tpu_custom_call.1} parent=11 // pred_region
          %107 = vsyncadd [#allocation6], 0
          %s108 = sshll.u32 %s1, 4
          %s109 = int_to_ptr.hbm [resolvable:$true] %s108
          %s110 = sshll.u32 [#allocation5], 4
          %s111 = int_to_ptr.vmem [resolvable:$true] %s110
          %116 = dma.hbm_to_vmem [thread:$0]  %s109, 1536, %s111, [#allocation6], 384, 384, 24
        $region16: #{tpu_custom_call.1} parent=11 // pred_fallthru
          _
      $region12: #{tpu_custom_call.1} parent=5 // pred_fallthru
        _
      %p117 = scmp.lt.s32.totalorder %s15, 2
      // Predicated region
      $region17: #{tpu_custom_call.1} parent=5 // pred_check
        %p118 = pneg %p117
      $region18: #{tpu_custom_call.1} parent=5 // pred_check_branch
        %120 = sbr.rel (%p118) target = $region20
      $region19: #{tpu_custom_call.1} parent=5 // pred_region
        // Predicated region
        $region21: #{tpu_custom_call.1} parent=19 // pred_check
          %p121 = pneg %p35
        $region22: #{tpu_custom_call.1} parent=19 // pred_check_branch
          %123 = sbr.rel (%p121) target = $region24
        $region23: #{tpu_custom_call.1} parent=19 // pred_region
          %s124 = sand.u32 %s25, 1
          %s125 = scalar_lea.sflag [#allocation3], %s124
          %s126 = sand.u32 %s25, 1
          %s127 = smul.addr %s126, 8
          %s128 = scalar_lea.vmem [#allocation2], %s127
          %130 = vsyncadd %s125, 0
          %s131 = smul.addr %s15, 8
          %s132 = scalar_lea.hbm %s0, %s131
          %s134 = sshll.u32 %s132, 4
          %s135 = int_to_ptr.hbm [resolvable:$true] %s134
          %s136 = sshll.u32 %s128, 4
          %s137 = int_to_ptr.vmem [resolvable:$true] %s136
          %139 = dma.hbm_to_vmem [thread:$0]  %s135, 128, %s137, %s125
        $region24: #{tpu_custom_call.1} parent=19 // pred_fallthru
          _
      $region20: #{tpu_custom_call.1} parent=5 // pred_fallthru
        _
      %p140 = scmp.le.s32.totalorder 1, %s15
      %p141 = scmp.lt.s32.totalorder %s15, 3
      %p142 = pnand %p140, %p141
      %p143 = pneg %p142
      // Predicated region
      $region25: #{tpu_custom_call.1} parent=5 // pred_check
        _
      $region26: #{tpu_custom_call.1} parent=5 // pred_check_branch
        %145 = sbr.rel (%p142) target = $region28
      $region27: #{tpu_custom_call.1} parent=5 // pred_region
        %s146 = ssub.s32 %s15, 1
        %s147 = sand.u32 %s28, 1
        %s148 = scalar_lea.sflag [#allocation3], %s147
        %s149 = sand.u32 %s28, 1
        %s150 = smul.addr %s149, 8
        %s151 = scalar_lea.vmem [#allocation2], %s150
        // Predicated region
        $region29: #{tpu_custom_call.1} parent=27 // pred_check
          %p152 = pneg %p41
        $region30: #{tpu_custom_call.1} parent=27 // pred_check_branch
          %154 = sbr.rel (%p152) target = $region32
        $region31: #{tpu_custom_call.1} parent=27 // pred_region
          %156 = dma.done %s148, 128
        $region32: #{tpu_custom_call.1} parent=27 // pred_fallthru
          _
        // Predicated region
        $region33: #{tpu_custom_call.1} parent=27 // pred_check
          %p157 = pneg %p62
        $region34: #{tpu_custom_call.1} parent=27 // pred_check_branch
          %159 = sbr.rel (%p157) target = $region36
        $region35: #{tpu_custom_call.1} parent=27 // pred_region
          %161 = dma.done [#allocation6], 1536
        $region36: #{tpu_custom_call.1} parent=27 // pred_fallthru
          _
        %s162 = sand.u32 %s28, 1
        %s163 = scalar_lea.sflag [#allocation3], %s162
        %s164 = sand.u32 %s28, 1
        %s165 = smul.addr %s164, 8
        %s166 = scalar_lea.vmem [#allocation2], %s165
        %p167 = pneg %p41
        %p168 = pneg %p38
        %p169 = pneg %p62
        %p170 = pneg %p59
        %p171 = pneg %p88
        %p172 = pneg %p85
        %s173 = sand.u32 %s75, 1
        %s174 = scalar_lea.sflag [#allocation4], %s173
        %s175 = sand.u32 %s75, 1
        %s176 = smul.addr %s175, 8
        %s177 = scalar_lea.vmem [#allocation7], %s176
        %v178 = vld [vmem:[%s151] sm:$0xff]
        %v179 = vld [vmem:[#allocation5] sm:$0xff]
        %v180 = vld [vmem:[#allocation5 + $0x8] sm:$0xff]
        %v181 = vld [vmem:[#allocation5 + $0x10] sm:$0xff]
        %v182 = vld [vmem:[#allocation5 + $0x18] sm:$0xff]
        %v183 = vld [vmem:[#allocation5 + $0x20] sm:$0xff]
        %v184 = vld [vmem:[#allocation5 + $0x28] sm:$0xff]
        %v185 = vld [vmem:[#allocation5 + $0x30] sm:$0xff]
        %v186 = vld [vmem:[#allocation5 + $0x38] sm:$0xff]
        %v187 = vld [vmem:[#allocation5 + $0x40] sm:$0xff]
        %v188 = vld [vmem:[#allocation5 + $0x48] sm:$0xff]
        %v189 = vld [vmem:[#allocation5 + $0x50] sm:$0xff]
        %v190 = vld [vmem:[#allocation5 + $0x58] sm:$0xff]
        %vm191 = vcmask 261120
        %v193 = vsel %vm191, %v178, 0
        %195 = vmatpush.msra.mxu0 0.0
        %196 = vmatpush.msra.mxu0 0.0
        %197 = vmatpush.msra.mxu0 0.0
        %198 = vmatpush.msra.mxu0 0.0
        %199 = vmatpush.msra.mxu0 0.0
        %200 = vmatpush.msra.mxu0 0.0
        %201 = vmatpush.msra.mxu0 0.0
        %202 = vmatpush.msra.mxu0 0.0
        %203 = vmatpush.msra.mxu0 0.0
        %204 = vmatpush.msra.mxu0 0.0
        %205 = vmatpush.msra.mxu0 0.0
        %206 = vmatpush.msra.mxu0 0.0
        %207 = vmatpush.msra.mxu0 %v188
        %208 = vmatpush.msra.mxu0 %v185
        %209 = vmatpush.msra.mxu0 %v182
        %210 = vmatpush.msra.mxu0 %v179
        %211 = vmatmul.f32.gmra.mxu0 %v193
        %v212 = vpop.f32.mrf.mxu0
        %v213 = vadd.f32 0.0, %v212
        %214 = vdwg.mxu0
        %215 = vmatpush.msra.mxu0 0.0
        %216 = vmatpush.msra.mxu0 0.0
        %217 = vmatpush.msra.mxu0 0.0
        %218 = vmatpush.msra.mxu0 0.0
        %219 = vmatpush.msra.mxu0 0.0
        %220 = vmatpush.msra.mxu0 0.0
        %221 = vmatpush.msra.mxu0 0.0
        %222 = vmatpush.msra.mxu0 0.0
        %223 = vmatpush.msra.mxu0 0.0
        %224 = vmatpush.msra.mxu0 0.0
        %225 = vmatpush.msra.mxu0 0.0
        %226 = vmatpush.msra.mxu0 0.0
        %227 = vmatpush.msra.mxu0 %v189
        %228 = vmatpush.msra.mxu0 %v186
        %229 = vmatpush.msra.mxu0 %v183
        %230 = vmatpush.msra.mxu0 %v180
        %231 = vmatmul.f32.gmra.mxu0 %v193
        %v232 = vpop.f32.mrf.mxu0
        %v233 = vadd.f32 0.0, %v232
        %234 = vdwg.mxu0
        %235 = vmatpush.msra.mxu0 0.0
        %236 = vmatpush.msra.mxu0 0.0
        %237 = vmatpush.msra.mxu0 0.0
        %238 = vmatpush.msra.mxu0 0.0
        %239 = vmatpush.msra.mxu0 0.0
        %240 = vmatpush.msra.mxu0 0.0
        %241 = vmatpush.msra.mxu0 0.0
        %242 = vmatpush.msra.mxu0 0.0
        %243 = vmatpush.msra.mxu0 0.0
        %244 = vmatpush.msra.mxu0 0.0
        %245 = vmatpush.msra.mxu0 0.0
        %246 = vmatpush.msra.mxu0 0.0
        %247 = vmatpush.msra.mxu0 %v190
        %248 = vmatpush.msra.mxu0 %v187
        %249 = vmatpush.msra.mxu0 %v184
        %250 = vmatpush.msra.mxu0 %v181
        %251 = vmatmul.f32.gmra.mxu0 %v193
        %v252 = vpop.f32.mrf.mxu0
        %v253 = vadd.f32 0.0, %v252
        %254 = vdwg.mxu0
        %255 = vmatpush.xpose.msra.mxu0 0.0
        %256 = vmatpush.xpose.msra.mxu0 0.0
        %257 = vmatpush.xpose.msra.mxu0 0.0
        %258 = vmatpush.xpose.msra.mxu0 0.0
        %259 = vmatpush.xpose.msra.mxu0 0.0
        %260 = vmatpush.xpose.msra.mxu0 0.0
        %261 = vmatpush.xpose.msra.mxu0 0.0
        %262 = vmatpush.xpose.msra.mxu0 0.0
        %263 = vmatpush.xpose.msra.mxu0 0.0
        %264 = vmatpush.xpose.msra.mxu0 0.0
        %265 = vmatpush.xpose.msra.mxu0 0.0
        %266 = vmatpush.xpose.msra.mxu0 0.0
        %267 = vmatpush.xpose.msra.mxu0 0.0
        %268 = vmatpush.xpose.msra.mxu0 0.0
        %269 = vmatpush.xpose.msra.mxu0 0.0
        %270 = vmatpush.xpose.msra.mxu0 %v233
        %271 = vmatmul.f32.gmra.mxu0 %v213
        %v272 = vpop.f32.mrf.mxu0
        %v273 = vadd.f32 0.0, %v272
        %274 = vdwg.mxu0
        %v275 = vlaneseq
        %v276 = vshrl.u32 %v275, 7
        %v277 = vlaneseq
        %v278 = vand.u32 %v277, 127
        %vm279 = vcmp.ge.s32.totalorder %v276, %v278
        %v280 = vsel %vm279, %v273, -1e+30
        %vm281 = vcmask 64512
        %v282 = vsel %vm281, %v280, -inf
        %283 = vmax.xlane.f32.xlu0 %v282
        %v284 = vpop.xlane.xlu0 %283
        %v285 = vsub.f32 %v280, %v284
        %v286 = vmul.f32 %v285, 1.442695
        %v287 = vpow.pop %v286
        %v288 = vsel %vm281, %v287, 0.0
        %289 = vadd.xlane.f32.xlu0 %v288
        %v290 = vpop.xlane.xlu0 %289
        %v291 = vrcp.pop %v290
        %v292 = vmul.f32 %v290, %v291
        %v293 = vsub.f32 1.0, %v292
        %v294 = vmul.f32 %v291, %v293
        %v295 = vadd.f32 %v291, %v294
        %vm296 = vweird.f32 %v290
        %vm297 = vweird.f32 %v291
        %vm298 = vmor %vm296, %vm297
        %v299 = vsel %vm298, %v291, %v295
        %v300 = vand.u32 2147483647, %v290
        %vm301 = vcmp.eq.f32.partialorder %v300, 8.507059e+37
        %v302 = vand.u32 %v290, 2147483648
        %v303 = vor.u32 1.1754944e-38, %v302
        %v304 = vsel %vm301, %v303, %v299
        %v305 = vmul.f32 %v287, %v304
        %v307 = vsel %vm281, %v305, 0
        %309 = vmatpush.msra.mxu0 0.0
        %310 = vmatpush.msra.mxu0 0.0
        %311 = vmatpush.msra.mxu0 0.0
        %312 = vmatpush.msra.mxu0 0.0
        %313 = vmatpush.msra.mxu0 0.0
        %314 = vmatpush.msra.mxu0 0.0
        %315 = vmatpush.msra.mxu0 0.0
        %316 = vmatpush.msra.mxu0 0.0
        %317 = vmatpush.msra.mxu0 0.0
        %318 = vmatpush.msra.mxu0 0.0
        %319 = vmatpush.msra.mxu0 0.0
        %320 = vmatpush.msra.mxu0 0.0
        %321 = vmatpush.msra.mxu0 0.0
        %322 = vmatpush.msra.mxu0 0.0
        %323 = vmatpush.msra.mxu0 0.0
        %324 = vmatpush.msra.mxu0 %v253
        %325 = vmatmul.f32.gmra.mxu0 %v307
        %v326 = vpop.f32.mrf.mxu0
        %v327 = vadd.f32 0.0, %v326
        %328 = vdwg.mxu0
        %329 = vst [vmem:[%s177] sm:$0xff] %v327
        %s330 = sand.u32 %s75, 1
        %s331 = scalar_lea.sflag [#allocation4], %s330
        %s332 = sand.u32 %s75, 1
        %s333 = smul.addr %s332, 8
        %s334 = scalar_lea.vmem [#allocation7], %s333
        // Predicated region
        $region37: #{tpu_custom_call.1} parent=27 // pred_check
          %p335 = pneg %p85
        $region38: #{tpu_custom_call.1} parent=27 // pred_check_branch
          %337 = sbr.rel (%p335) target = $region40
        $region39: #{tpu_custom_call.1} parent=27 // pred_region
          %339 = vsyncadd %s331, 0
          %s340 = smul.addr %s20, 8
          %s341 = scalar_lea.hbm %s2, %s340
          %s343 = sshll.u32 %s334, 4
          %s344 = int_to_ptr.vmem [resolvable:$true] %s343
          %s345 = sshll.u32 %s341, 4
          %s346 = int_to_ptr.hbm [resolvable:$true] %s345
          %348 = dma.vmem_to_hbm [thread:$0]  %s344, 128, %s346, %s331
        $region40: #{tpu_custom_call.1} parent=27 // pred_fallthru
          _
      $region28: #{tpu_custom_call.1} parent=5 // pred_fallthru
        _
      %p349 = scmp.le.s32.totalorder 2, %s15
      // Predicated region
      $region41: #{tpu_custom_call.1} parent=5 // pred_check
        %p350 = pneg %p349
      $region42: #{tpu_custom_call.1} parent=5 // pred_check_branch
        %352 = sbr.rel (%p350) target = $region44
      $region43: #{tpu_custom_call.1} parent=5 // pred_region
        %s353 = ssub.s32 %s15, 2
        // Predicated region
        $region45: #{tpu_custom_call.1} parent=43 // pred_check
          %p354 = pneg %p91
        $region46: #{tpu_custom_call.1} parent=43 // pred_check_branch
          %356 = sbr.rel (%p354) target = $region48
        $region47: #{tpu_custom_call.1} parent=43 // pred_region
          %s357 = sand.u32 %s76, 1
          %s358 = scalar_lea.sflag [#allocation4], %s357
          %s359 = sand.u32 %s76, 1
          %s360 = smul.addr %s359, 8
          %s361 = scalar_lea.vmem [#allocation7], %s360
          %363 = dma.done %s358, 128
        $region48: #{tpu_custom_call.1} parent=43 // pred_fallthru
          _
      $region44: #{tpu_custom_call.1} parent=5 // pred_fallthru
        _
    $region6: #{tpu_custom_call.1} parent=1 // loop_footer
      %s19 = sadd.s32 1, %s15
    $region7: #{tpu_custom_call.1} parent=1 // loop_footer_branch
      %14 = sbr.rel target = $region3
    $region8: #{tpu_custom_call.1} parent=1 // loop_exit
      _
    %364 = vsyncpa [#allocation3], 1
    %s365 = scalar_lea.sflag [#allocation3], 1
    %366 = vsyncpa %s365, 1
    %367 = vsyncpa [#allocation6], 1
    %368 = vsyncpa [#allocation4], 1
    %s369 = scalar_lea.sflag [#allocation4], 1
    %370 = vsyncpa %s369, 1

</llo_original>
